<compile_context>
chip_gen: v7x
topology: tpu7x:2x2x1
jax: 0.10.0
libtpu: 0.0.40
codegen_flags: <defaults>
</compile_context>

<pallas_src>
import functools

import jax
import jax.numpy as jnp
from jax import lax
from jax.experimental import pallas as pl
from jax.experimental.pallas import tpu as pltpu


def _deconv_stats_kernel(rhs_ref, w_ref, y_ref, stats_ref, *, wp, ow):
    """Fused transposed-conv matmul + masked per-channel training-BN partial stats.

    rhs_ref:   (K, TMB)    bf16  flat-shift im2col (K = KH*KW*Cin, TMB lanes)
    w_ref:     (Cout, K)   bf16  dense-conv weights (tap-major / Cin-minor rows)
    y_ref:     (Cout, TMB) bf16  wide conv output (lane-dense; keeps Wp>OW junk)
    stats_ref: (Cout, 2)   f32   [sum, sum-of-squares] over the valid columns
    """
    y = jnp.dot(w_ref[...], rhs_ref[...], preferred_element_type=jnp.float32)
    y_ref[...] = y.astype(y_ref.dtype)
    # In-kernel valid-column mask (cheap VPU work hidden under the matmul); only
    # the stats need it -- the junk columns of y are sliced off in the wrapper.
    col = lax.broadcasted_iota(jnp.int32, y.shape, 1) % wp
    ym = jnp.where(col < ow, y, 0.0)
    stats_ref[:, 0:1] = jnp.sum(ym, axis=1, keepdims=True)
    stats_ref[:, 1:2] = jnp.sum(ym * ym, axis=1, keepdims=True)


def deconv_block(x_nchw, weight, gamma, beta, *, stride, padding, out_padding,
                 eps=1e-5):
    N, Cin, H, W = x_nchw.shape
    Cin_w, Cout, KH, KW = weight.shape
    assert Cin == Cin_w

    OH = (H - 1) * stride - 2 * padding + KH + out_padding
    OW = (W - 1) * stride - 2 * padding + KW + out_padding
    ph = KH - 1 - padding
    pw = KW - 1 - padding
    assert ph >= 0 and pw >= 0, "padding > kernel_size-1 not supported"

    # ConvTranspose2d == stride-1 dense conv over an interior-dilated, edge-padded
    # input.  Dilation + padding fused into one lax.pad (no scatter pass).
    x = x_nchw.astype(jnp.bfloat16)
    xp = lax.pad(x, jnp.array(0, x.dtype),
                 ((0, 0, 0), (0, 0, 0),
                  (ph, ph + out_padding, stride - 1),
                  (pw, pw + out_padding, stride - 1)))
    Hp, Wp = xp.shape[2], xp.shape[3]
    assert Hp == OH + KH - 1 and Wp == OW + KW - 1

    # Flat-shift im2col: for the stride-1 conv over the flattened padded image,
    # tap (kh,kw) is the contiguous lane window [d, d+TM) with d = kh*Wp + kw,
    # where the "wide" output index g = oh*Wp + ow runs over TM = OH*Wp lanes
    # (columns ow >= OW are wrap-around junk).  Stacking all KH*KW taps gives a
    # (K, TM) RHS so the kernel does one K = KH*KW*Cin contraction.
    TM = OH * Wp
    d_max = (KH - 1) * Wp + (KW - 1)
    L_x = TM + d_max
    K = KH * KW * Cin
    x_flat = xp.reshape(N, Cin, Hp * Wp)
    x_flat = jnp.pad(x_flat, ((0, 0), (0, 0), (0, L_x - Hp * Wp)))
    taps = tuple(kh * Wp + kw for kh in range(KH) for kw in range(KW))
    rhs = jnp.stack([x_flat[:, :, d:d + TM] for d in taps], axis=1)  # (N,KH*KW,Cin,TM)
    rhs = rhs.reshape(N, K, TM)

    # Dense-conv weights as one (Cout, K) matrix, rows tap-major / Cin-minor to
    # match the RHS row order above.
    w_flip = weight[:, :, ::-1, ::-1]                               # (Cin,Cout,KH,KW)
    w_mat = jnp.transpose(w_flip, (1, 2, 3, 0)).reshape(Cout, K)    # (Cout, KH*KW*Cin)
    w_mat = w_mat.astype(jnp.bfloat16)

    # Images-per-step fold: grid steps are a serial loop on single-TC v5e/v6e
    # (so merge images into the lane dim) but the source of megacore parallelism
    # on v7x (so keep >= 2 steps when N >= 2).  Cap the fold so the (Cout, TMB)
    # f32 accumulator stays <= ~16 vregs (~2048 lanes) and never spills.
    LANE_BUDGET = 2048
    NB = max(1, min(N, LANE_BUDGET // TM))
    if N >= 2:
        NB = min(NB, N // 2)          # keep >= 2 parallel steps for v7x's 2 TCs
    NB = max(1, NB)
    while N % NB:
        NB -= 1
    n_steps = N // NB
    TMB = NB * TM
    if NB > 1:
        rhs = rhs.reshape(n_steps, NB, K, TM).transpose(0, 2, 1, 3)
    rhs = rhs.reshape(n_steps, K, TMB)

    y_wide, stats = pl.pallas_call(
        functools.partial(_deconv_stats_kernel, wp=Wp, ow=OW),
        out_shape=(jax.ShapeDtypeStruct((n_steps, Cout, TMB), jnp.bfloat16),
                   jax.ShapeDtypeStruct((n_steps, Cout, 2), jnp.float32)),
        grid=(n_steps,),
        in_specs=[pl.BlockSpec((None, K, TMB), lambda s: (s, 0, 0)),
                  pl.BlockSpec((Cout, K), lambda s: (0, 0))],
        out_specs=(pl.BlockSpec((None, Cout, TMB), lambda s: (s, 0, 0)),
                   pl.BlockSpec((None, Cout, 2), lambda s: (s, 0, 0))),
        compiler_params=pltpu.CompilerParams(dimension_semantics=("parallel",)),
    )(rhs, w_mat)

    # Training-mode BatchNorm (biased variance over the N*OH*OW valid positions),
    # folded into a single per-channel scale/bias (tiny (Cout,) math).
    count = float(N * OH * OW)
    tot = jnp.sum(stats, axis=0)                        # (Cout, 2)
    mean = tot[:, 0] / count
    var = jnp.maximum(tot[:, 1] / count - mean * mean, 0.0)
    scale = gamma.astype(jnp.float32) * lax.rsqrt(var + eps)
    bias = beta.astype(jnp.float32) - mean * scale

    # BN + ReLU epilogue deliberately left to XLA (perf review): slice + scale +
    # bias + relu fuse into one elementwise pass, avoiding a second pallas_call
    # whose OW-lane (=32) output blocks would force masked vst.msk stores.
    y4 = y_wide.reshape(n_steps, Cout, NB, OH, Wp)
    y4 = jnp.transpose(y4, (0, 2, 1, 3, 4)).reshape(N, Cout, OH, Wp)
    out = jnp.maximum(
        y4[..., :OW].astype(jnp.float32) * scale.reshape(1, Cout, 1, 1)
        + bias.reshape(1, Cout, 1, 1), 0.0)
    return out                                          # NCHW f32, matches PyTorch


if __name__ == "__main__":
    key = jax.random.PRNGKey(0)
    k_x, k_w = jax.random.split(key)

    # DeConvBlock(in_dim=4, out_dim=8, kernel_size=4, stride=2, padding=1, out_padding=0)
    N, Cin, H, W = 2, 4, 16, 16
    Cout, Ksz, stride, padding, out_padding = 8, 4, 2, 1, 0

    x = jax.random.normal(k_x, (N, Cin, H, W), jnp.float32)
    weight = jax.random.normal(k_w, (Cin, Cout, Ksz, Ksz), jnp.float32) * 0.1
    gamma = jnp.ones((Cout,), jnp.float32)   # BatchNorm2d default affine init
    beta = jnp.zeros((Cout,), jnp.float32)

    out = deconv_block(x, weight, gamma, beta,
                       stride=stride, padding=padding, out_padding=out_padding)
    out = jax.block_until_ready(out)

    # pure-JAX reference (ConvTranspose2d -> training-mode BN (biased var) -> ReLU)
    w_conv = jnp.transpose(weight, (1, 0, 2, 3))[:, :, ::-1, ::-1]       # OIHW, flipped
    conv_ref = lax.conv_general_dilated(
        x, w_conv, window_strides=(1, 1),
        padding=[(Ksz - 1 - padding, Ksz - 1 - padding + out_padding)] * 2,
        lhs_dilation=(stride, stride),
        dimension_numbers=("NCHW", "OIHW", "NCHW"))
    mean = conv_ref.mean(axis=(0, 2, 3), keepdims=True)
    var = conv_ref.var(axis=(0, 2, 3), keepdims=True)
    ref = jnp.maximum((conv_ref - mean) / jnp.sqrt(var + 1e-5)
                      * gamma.reshape(1, -1, 1, 1) + beta.reshape(1, -1, 1, 1), 0.0)

    OH = (H - 1) * stride - 2 * padding + Ksz + out_padding
    assert out.shape == (N, Cout, OH, OH), out.shape
    if not bool(jnp.allclose(out, ref, atol=2e-2, rtol=2e-2)):
        raise AssertionError("Pallas DeConvBlock does not match JAX reference")
    print("KERNEL_OK")
</pallas_src>

<mosaic_0001>
module attributes {stable_mosaic.version = 11 : i64} {
  func.func @_deconv_stats_kernel(%arg0: i32, %arg1: memref<1x64x1120xbf16, #tpu.memory_space<vmem>>, %arg2: memref<8x64xbf16, #tpu.memory_space<vmem>>, %arg3: memref<1x8x1120xbf16, #tpu.memory_space<vmem>>, %arg4: memref<1x8x2xf32, #tpu.memory_space<vmem>>) attributes {dimension_semantics = [#tpu.dimension_semantics<parallel>], iteration_bounds = array<i64: 2>, scalar_prefetch = 0 : i64, scratch_operands = 0 : i64, tpu.core_type = #tpu.core_type<tc>, window_params = [{transform_indices = @transform_0, window_bounds = array<i64: 1, 64, 1120>}, {pipeline_mode = #tpu.pipeline_mode<synchronous>, transform_indices = @transform_1, window_bounds = array<i64: 8, 64>}, {transform_indices = @transform_2, window_bounds = array<i64: 1, 8, 1120>}, {transform_indices = @transform_3, window_bounds = array<i64: 1, 8, 2>}]} {
    %c0 = arith.constant 0 : index
    %c0_0 = arith.constant 0 : index
    %0 = vector.load %arg2[%c0, %c0_0] : memref<8x64xbf16, #tpu.memory_space<vmem>>, vector<8x64xbf16>
    %c0_1 = arith.constant 0 : index
    %c0_2 = arith.constant 0 : index
    %c0_3 = arith.constant 0 : index
    %1 = vector.load %arg1[%c0_1, %c0_2, %c0_3] : memref<1x64x1120xbf16, #tpu.memory_space<vmem>>, vector<1x64x1120xbf16>
    %2 = vector.shape_cast %1 : vector<1x64x1120xbf16> to vector<64x1120xbf16>
    %cst = arith.constant dense<0.000000e+00> : vector<8x1120xf32>
    %3 = tpu.matmul %0, %2, %cst {dimension_numbers = #tpu.dot_dimension_numbers<[1], [0], [0], [1], [0, 0, 1, 1], [], []>} : vector<8x64xbf16>, vector<64x1120xbf16>, vector<8x1120xf32> -> vector<8x1120xf32>
    %4 = arith.truncf %3 : vector<8x1120xf32> to vector<8x1120xbf16>
    %c0_4 = arith.constant 0 : index
    %c0_5 = arith.constant 0 : index
    %c0_6 = arith.constant 0 : index
    %5 = vector.load %arg3[%c0_4, %c0_5, %c0_6] : memref<1x8x1120xbf16, #tpu.memory_space<vmem>>, vector<1x8x1120xbf16>
    %6 = vector.shape_cast %5 : vector<1x8x1120xbf16> to vector<8x1120xbf16>
    %7 = vector.shape_cast %4 : vector<8x1120xbf16> to vector<1x8x1120xbf16>
    tpu.vector_store %arg3[%c0_4, %c0_5, %c0_6], %7 {strides = array<i32>} : memref<1x8x1120xbf16, #tpu.memory_space<vmem>>, vector<1x8x1120xbf16>,
    %8 = tpu.iota {dimensions = array<i32: 1>} : vector<8x1120xi32>
    %c35_i32 = arith.constant 35 : i32
    %c0_i32 = arith.constant 0 : i32
    %9 = arith.cmpi eq, %c35_i32, %c0_i32 : i32
    %c1_i32 = arith.constant 1 : i32
    %10 = arith.select %9, %c1_i32, %c35_i32 : i32
    %11 = vector.broadcast %10 : i32 to vector<8x1120xi32>
    %12 = arith.remsi %8, %11 : vector<8x1120xi32>
    %c0_i32_7 = arith.constant 0 : i32
    %13 = vector.broadcast %c0_i32_7 : i32 to vector<8x1120xi32>
    %14 = arith.cmpi ne, %12, %13 : vector<8x1120xi32>
    %c0_i32_8 = arith.constant 0 : i32
    %15 = vector.broadcast %c0_i32_8 : i32 to vector<8x1120xi32>
    %16 = arith.cmpi slt, %12, %15 : vector<8x1120xi32>
    %c0_i32_9 = arith.constant 0 : i32
    %17 = arith.cmpi slt, %10, %c0_i32_9 : i32
    %18 = vector.broadcast %17 : i1 to vector<8x1120xi1>
    %19 = vector.broadcast %18 : vector<8x1120xi1> to vector<8x1120xi1>
    %20 = arith.xori %16, %19 : vector<8x1120xi1>
    %21 = arith.andi %20, %14 : vector<8x1120xi1>
    %22 = vector.broadcast %10 : i32 to vector<8x1120xi32>
    %23 = arith.addi %12, %22 : vector<8x1120xi32>
    %24 = arith.select %21, %23, %12 : vector<8x1120xi1>, vector<8x1120xi32>
    %c32_i32 = arith.constant 32 : i32
    %25 = vector.broadcast %c32_i32 : i32 to vector<8x1120xi32>
    %26 = arith.cmpi slt, %24, %25 : vector<8x1120xi32>
    %cst_10 = arith.constant 0.000000e+00 : f32
    %27 = vector.broadcast %cst_10 : f32 to vector<8x1120xf32>
    %28 = arith.select %26, %3, %27 : vector<8x1120xi1>, vector<8x1120xf32>
    %cst_11 = arith.constant dense<0.000000e+00> : vector<8xf32>
    %29 = vector.multi_reduction <add>, %28, %cst_11 [1] : vector<8x1120xf32> to vector<8xf32>
    %30 = vector.shape_cast %29 : vector<8xf32> to vector<8x1xf32>
    %c0_12 = arith.constant 0 : index
    %c0_13 = arith.constant 0 : index
    %c0_14 = arith.constant 0 : index
    %31 = vector.load %arg4[%c0_12, %c0_13, %c0_14] : memref<1x8x2xf32, #tpu.memory_space<vmem>>, vector<1x8x1xf32>
    %32 = vector.shape_cast %31 : vector<1x8x1xf32> to vector<8x1xf32>
    %33 = vector.shape_cast %30 : vector<8x1xf32> to vector<1x8x1xf32>
    tpu.vector_store %arg4[%c0_12, %c0_13, %c0_14], %33 {strides = array<i32>} : memref<1x8x2xf32, #tpu.memory_space<vmem>>, vector<1x8x1xf32>,
    %34 = arith.mulf %28, %28 : vector<8x1120xf32>
    %cst_15 = arith.constant dense<0.000000e+00> : vector<8xf32>
    %35 = vector.multi_reduction <add>, %34, %cst_15 [1] : vector<8x1120xf32> to vector<8xf32>
    %36 = vector.shape_cast %35 : vector<8xf32> to vector<8x1xf32>
    %c0_16 = arith.constant 0 : index
    %c0_17 = arith.constant 0 : index
    %c1 = arith.constant 1 : index
    %37 = vector.load %arg4[%c0_16, %c0_17, %c1] : memref<1x8x2xf32, #tpu.memory_space<vmem>>, vector<1x8x1xf32>
    %38 = vector.shape_cast %37 : vector<1x8x1xf32> to vector<8x1xf32>
    %39 = vector.shape_cast %36 : vector<8x1xf32> to vector<1x8x1xf32>
    tpu.vector_store %arg4[%c0_16, %c0_17, %c1], %39 {strides = array<i32>} : memref<1x8x2xf32, #tpu.memory_space<vmem>>, vector<1x8x1xf32>,
    return
  }
  func.func @transform_0(%arg0: i32) -> (i32, i32, i32) {
    %c0_i32 = arith.constant 0 : i32
    %c0_i32_0 = arith.constant 0 : i32
    %c0_i32_1 = arith.constant 0 : i32
    return %arg0, %c0_i32, %c0_i32_0 : i32, i32, i32
  }
  func.func @transform_1(%arg0: i32) -> (i32, i32) {
    %c0_i32 = arith.constant 0 : i32
    %c0_i32_0 = arith.constant 0 : i32
    %c0_i32_1 = arith.constant 0 : i32
    return %c0_i32, %c0_i32_0 : i32, i32
  }
  func.func @transform_2(%arg0: i32) -> (i32, i32, i32) {
    %c0_i32 = arith.constant 0 : i32
    %c0_i32_0 = arith.constant 0 : i32
    %c0_i32_1 = arith.constant 0 : i32
    return %arg0, %c0_i32, %c0_i32_0 : i32, i32, i32
  }
  func.func @transform_3(%arg0: i32) -> (i32, i32, i32) {
    %c0_i32 = arith.constant 0 : i32
    %c0_i32_0 = arith.constant 0 : i32
    %c0_i32_1 = arith.constant 0 : i32
    return %arg0, %c0_i32, %c0_i32_0 : i32, i32, i32
  }
}

</mosaic_0001>

<llo_original>
// kernel: tpu_custom_call.1
$region0: #{tpu_custom_call.1}
  #allocation0 [shape = 'u32[]', space=smem, size = 0x4, offset = 0x4, fixed_abs, tag = 'smem constant byte address 0x4 - core index']
  #allocation1 [shape = 'u32[144,128]{1,0:T(1,128)}', space=vmem, size = 0x12000, scoped, tag = 'internal scratch']
  %s0 = inlined_call_operand.hbm [shape: bf16[2,64,1120], index: 0, kind: input, shape index: {}]
  %s1 = inlined_call_operand.hbm [shape: bf16[8,64], index: 1, kind: input, shape index: {}]
  %s2 = inlined_call_operand.hbm [shape: bf16[2,8,1120], index: 2, kind: output, shape index: {0}]
  %s3 = inlined_call_operand.vmem [shape: f32[2,8,2], index: 3, kind: output, shape index: {1}]
  %4 = xla_tuple %s2, %s3
  %s5 = sld [smem:[#allocation0]]
  $region57: #{tpu_custom_call.1} parent=0
    _
  %s7 = ssub.s32 1, %s5
  %s8 = scalar_select 0, %s7, %s5
  $region1: #{tpu_custom_call.1} parent=0
    #allocation2 [shape = 'u8[294912]{0}', space=vmem, size = 0x48000, scoped, tag = 'input window, operand 0']
    #allocation3 [shape = 's32[2]{0}', space=sflag, size = 0x8, scoped, tag = 'scoped memory for tpu_custom_call.1']
    #allocation4 [shape = 's32[2]{0}', space=sflag, size = 0x8, scoped, tag = 'scoped memory for tpu_custom_call.1']
    #allocation5 [shape = 'u8[2048]{0}', space=vmem, size = 0x800, scoped, tag = 'input window, operand 1, single buffered']
    #allocation6 [shape = 's32[1]{0}', space=sflag, size = 0x4, scoped, tag = 'scoped memory for tpu_custom_call.1']
    #allocation7 [shape = 'u8[36864]{0}', space=vmem, size = 0x9000, scoped, tag = 'output window, operand 0']
    %9 = vsyncpa [#allocation3], 0
    %s10 = scalar_lea.sflag [#allocation3], 1
    %11 = vsyncpa %s10, 0
    %12 = vsyncpa [#allocation6], 0
    %13 = vsyncpa [#allocation4], 0
    %s14 = scalar_lea.sflag [#allocation4], 1
    %15 = vsyncpa %s14, 0
    loop: start=0, step=1, limit=4
    $region2: #{tpu_custom_call.1} parent=1 // loop_pre_header
      _
    $region3: #{tpu_custom_call.1} parent=1 // loop_header
      %s17 = sphi 0, %s21
      %p18 = scmp.ge.s32.totalorder %s17, 4
      %s27 = sphi 0, %s29
      %s30 = sphi 0, %s27
      %s31 = sphi 0, %s30
      %s47 = sphi 0, %s31
      %s51 = sphi 0, %s51
      %s53 = sphi 0, %s51
      %s54 = sphi 0, %s53
      %s68 = sphi 0, %s54
      %s74 = sphi 0, %s76
      %s77 = sphi 0, %s74
      %s78 = sphi 0, %s77
      %s94 = sphi 0, %s78
      %s100 = sphi 0, %s102
      %s103 = sphi 0, %s100
      %s104 = sphi 0, %s103
      %s120 = sphi 0, %s104
    $region4: #{tpu_custom_call.1} parent=1 // loop_header_branch
      %20 = sbr.rel (%p18) target = $region8
    $region5: #{tpu_custom_call.1} parent=1 // loop_body
      %s22 = ssub.s32 %s17, 1
      %s23 = ssub.s32 %s17, 2
      %s24 = sadd.s32 %s17, 1
      %s25 = ssub.s32 %s17, %s24
      %p26 = scmp.eq.s32.totalorder %s25, 0
      %s28 = sadd.s32 %s27, 1
      %s29 = scalar_select %p26, %s27, %s28
      %p32 = pneg %p26
      %p33 = scmp.eq.s32.totalorder %s17, 1
      %p34 = por %p32, %p33
      %p35 = scmp.ne.s32.totalorder %s27, %s30
      %p36 = scmp.eq.s32.totalorder %s17, 0
      %p37 = por %p35, %p36
      %p38 = scmp.ne.s32.totalorder %s27, %s30
      %p39 = scmp.eq.s32.totalorder %s22, 1
      %p40 = por %p38, %p39
      %p41 = scmp.ne.s32.totalorder %s30, %s31
      %p42 = scmp.eq.s32.totalorder %s22, 0
      %p43 = por %p41, %p42
      %p44 = scmp.ne.s32.totalorder %s30, %s31
      %p45 = scmp.eq.s32.totalorder %s23, 1
      %p46 = por %p44, %p45
      %p48 = scmp.ne.s32.totalorder %s31, %s47
      %p49 = scmp.eq.s32.totalorder %s23, 0
      %p50 = por %p48, %p49
      %s52 = sadd.s32 %s51, 1
      %p55 = scmp.eq.s32.totalorder %s17, 1
      %p56 = scmp.ne.s32.totalorder %s51, %s53
      %p57 = scmp.eq.s32.totalorder %s17, 0
      %p58 = por %p56, %p57
      %p59 = scmp.ne.s32.totalorder %s51, %s53
      %p60 = scmp.eq.s32.totalorder %s22, 1
      %p61 = por %p59, %p60
      %p62 = scmp.ne.s32.totalorder %s53, %s54
      %p63 = scmp.eq.s32.totalorder %s22, 0
      %p64 = por %p62, %p63
      %p65 = scmp.ne.s32.totalorder %s53, %s54
      %p66 = scmp.eq.s32.totalorder %s23, 1
      %p67 = por %p65, %p66
      %p69 = scmp.ne.s32.totalorder %s54, %s68
      %p70 = scmp.eq.s32.totalorder %s23, 0
      %p71 = por %p69, %p70
      %s72 = ssub.s32 %s17, %s24
      %p73 = scmp.eq.s32.totalorder %s72, 0
      %s75 = sadd.s32 %s74, 1
      %s76 = scalar_select %p73, %s74, %s75
      %p79 = pneg %p73
      %p80 = scmp.eq.s32.totalorder %s17, 1
      %p81 = por %p79, %p80
      %p82 = scmp.ne.s32.totalorder %s74, %s77
      %p83 = scmp.eq.s32.totalorder %s17, 0
      %p84 = por %p82, %p83
      %p85 = scmp.ne.s32.totalorder %s74, %s77
      %p86 = scmp.eq.s32.totalorder %s22, 1
      %p87 = por %p85, %p86
      %p88 = scmp.ne.s32.totalorder %s77, %s78
      %p89 = scmp.eq.s32.totalorder %s22, 0
      %p90 = por %p88, %p89
      %p91 = scmp.ne.s32.totalorder %s77, %s78
      %p92 = scmp.eq.s32.totalorder %s23, 1
      %p93 = por %p91, %p92
      %p95 = scmp.ne.s32.totalorder %s78, %s94
      %p96 = scmp.eq.s32.totalorder %s23, 0
      %p97 = por %p95, %p96
      %s98 = ssub.s32 %s17, %s24
      %p99 = scmp.eq.s32.totalorder %s98, 0
      %s101 = sadd.s32 %s100, 1
      %s102 = scalar_select %p99, %s100, %s101
      %p105 = pneg %p99
      %p106 = scmp.eq.s32.totalorder %s17, 1
      %p107 = por %p105, %p106
      %p108 = scmp.ne.s32.totalorder %s100, %s103
      %p109 = scmp.eq.s32.totalorder %s17, 0
      %p110 = por %p108, %p109
      %p111 = scmp.ne.s32.totalorder %s100, %s103
      %p112 = scmp.eq.s32.totalorder %s22, 1
      %p113 = por %p111, %p112
      %p114 = scmp.ne.s32.totalorder %s103, %s104
      %p115 = scmp.eq.s32.totalorder %s22, 0
      %p116 = por %p114, %p115
      %p117 = scmp.ne.s32.totalorder %s103, %s104
      %p118 = scmp.eq.s32.totalorder %s23, 1
      %p119 = por %p117, %p118
      %p121 = scmp.ne.s32.totalorder %s104, %s120
      %p122 = scmp.eq.s32.totalorder %s23, 0
      %p123 = por %p121, %p122
      %p124 = scmp.le.s32.totalorder 1, %s17
      %p125 = scmp.lt.s32.totalorder %s17, 3
      %p126 = pnand %p124, %p125
      %p127 = pneg %p126
      // Predicated region
      $region9: #{tpu_custom_call.1} parent=5 // pred_check
        _
      $region10: #{tpu_custom_call.1} parent=5 // pred_check_branch
        %129 = sbr.rel (%p126) target = $region12
      $region11: #{tpu_custom_call.1} parent=5 // pred_region
        %s130 = ssub.s32 %s17, 1
        // Predicated region
        $region13: #{tpu_custom_call.1} parent=11 // pred_check
          %p131 = pneg %p64
        $region14: #{tpu_custom_call.1} parent=11 // pred_check_branch
          %133 = sbr.rel (%p131) target = $region16
        $region15: #{tpu_custom_call.1} parent=11 // pred_region
          %s135 = ssub.s32 64, 64
          %136 = vsyncadd [#allocation6], %s135
          %s138 = sshll.u32 [#allocation5], 4
          %s139 = int_to_ptr.vmem [resolvable:$true] %s138
          %141 = dma.hbm_to_vmem [thread:$0]  %s1, 64, %s139, [#allocation6]
        $region16: #{tpu_custom_call.1} parent=11 // pred_fallthru
          _
      $region12: #{tpu_custom_call.1} parent=5 // pred_fallthru
        _
      %p142 = scmp.lt.s32.totalorder %s17, 2
      // Predicated region
      $region17: #{tpu_custom_call.1} parent=5 // pred_check
        %p143 = pneg %p142
      $region18: #{tpu_custom_call.1} parent=5 // pred_check_branch
        %145 = sbr.rel (%p143) target = $region20
      $region19: #{tpu_custom_call.1} parent=5 // pred_region
        // Predicated region
        $region21: #{tpu_custom_call.1} parent=19 // pred_check
          %p146 = pneg %p37
        $region22: #{tpu_custom_call.1} parent=19 // pred_check_branch
          %148 = sbr.rel (%p146) target = $region24
        $region23: #{tpu_custom_call.1} parent=19 // pred_region
          %s149 = sand.u32 %s27, 1
          %s150 = scalar_lea.sflag [#allocation3], %s149
          %s151 = sand.u32 %s27, 1
          %s152 = smul.addr %s151, 288
          %s153 = scalar_lea.vmem [#allocation2], %s152
          %s155 = ssub.s32 4608, 4608
          %156 = vsyncadd %s150, %s155
          %s157 = smul.addr %s17, 72
          %s158 = smul.addr %s157, 64
          %s159 = scalar_lea.hbm %s0, %s158
          %s160 = sshll.u32 %s153, 4
          %s161 = int_to_ptr.vmem [resolvable:$true] %s160
          %166 = dma.hbm_to_vmem [thread:$0]  %s159, 4608, %s161, %s150, 576, 576, 36
        $region24: #{tpu_custom_call.1} parent=19 // pred_fallthru
          _
      $region20: #{tpu_custom_call.1} parent=5 // pred_fallthru
        _
      %p167 = scmp.le.s32.totalorder 1, %s17
      %p168 = scmp.lt.s32.totalorder %s17, 3
      %p169 = pnand %p167, %p168
      %p170 = pneg %p169
      // Predicated region
      $region25: #{tpu_custom_call.1} parent=5 // pred_check
        _
      $region26: #{tpu_custom_call.1} parent=5 // pred_check_branch
        %172 = sbr.rel (%p169) target = $region28
      $region27: #{tpu_custom_call.1} parent=5 // pred_region
        %s173 = ssub.s32 %s17, 1
        %s174 = sand.u32 %s30, 1
        %s175 = scalar_lea.sflag [#allocation3], %s174
        %s176 = sand.u32 %s30, 1
        %s177 = smul.addr %s176, 288
        %s178 = scalar_lea.vmem [#allocation2], %s177
        // Predicated region
        $region29: #{tpu_custom_call.1} parent=27 // pred_check
          %p179 = pneg %p43
        $region30: #{tpu_custom_call.1} parent=27 // pred_check_branch
          %181 = sbr.rel (%p179) target = $region32
        $region31: #{tpu_custom_call.1} parent=27 // pred_region
          %182 = dma.done %s175, 4608
        $region32: #{tpu_custom_call.1} parent=27 // pred_fallthru
          _
        // Predicated region
        $region33: #{tpu_custom_call.1} parent=27 // pred_check
          %p183 = pneg %p64
        $region34: #{tpu_custom_call.1} parent=27 // pred_check_branch
          %185 = sbr.rel (%p183) target = $region36
        $region35: #{tpu_custom_call.1} parent=27 // pred_region
          %186 = dma.done [#allocation6], 64
        $region36: #{tpu_custom_call.1} parent=27 // pred_fallthru
          _
        %s187 = sand.u32 %s30, 1
        %s188 = scalar_lea.sflag [#allocation3], %s187
        %s189 = sand.u32 %s30, 1
        %s190 = smul.addr %s189, 288
        %s191 = scalar_lea.vmem [#allocation2], %s190
        %p192 = pneg %p43
        %p193 = pneg %p40
        %p194 = pneg %p64
        %p195 = pneg %p61
        %p196 = pneg %p90
        %p197 = pneg %p87
        %s198 = sand.u32 %s77, 1
        %s199 = scalar_lea.sflag [#allocation4], %s198
        %s200 = sand.u32 %s77, 1
        %s201 = smul.addr %s200, 36
        %s202 = scalar_lea.vmem [#allocation7], %s201
        %p203 = pneg %p116
        %p204 = pneg %p113
        %p205 = scmp.lt.s32.totalorder %s22, 1
        %s206 = scalar_select %p205, %s22, 1
        %s207 = smul.addr %s206, 8
        %s208 = scalar_lea.vmem %s3, %s207
        %p209 = scmp.lt.s32.totalorder %s22, 1
        %s210 = scalar_select %p209, %s22, 1
        %s211 = smul.addr %s210, 8
        %s212 = scalar_lea.vmem %s3, %s211
        %v214 = vld [vmem:[#allocation5] sm:$0xf]
        %v215 = vld [vmem:[%s178] sm:$0xff]
        %v216 = vld [vmem:[%s178 + $0x8] sm:$0xff]
        %v217 = vld [vmem:[%s178 + $0x10] sm:$0xff]
        %v218 = vld [vmem:[%s178 + $0x18] sm:$0xff]
        %v219 = vld [vmem:[%s178 + $0x20] sm:$0xf]
        %v220 = vld [vmem:[%s178 + $0x24] sm:$0xff]
        %v221 = vld [vmem:[%s178 + $0x2c] sm:$0xff]
        %v222 = vld [vmem:[%s178 + $0x34] sm:$0xff]
        %v223 = vld [vmem:[%s178 + $0x3c] sm:$0xff]
        %v224 = vld [vmem:[%s178 + $0x44] sm:$0xf]
        %v225 = vld [vmem:[%s178 + $0x48] sm:$0xff]
        %v226 = vld [vmem:[%s178 + $0x50] sm:$0xff]
        %v227 = vld [vmem:[%s178 + $0x58] sm:$0xff]
        %v228 = vld [vmem:[%s178 + $0x60] sm:$0xff]
        %v229 = vld [vmem:[%s178 + $0x68] sm:$0xf]
        %v230 = vld [vmem:[%s178 + $0x6c] sm:$0xff]
        %v231 = vld [vmem:[%s178 + $0x74] sm:$0xff]
        %v232 = vld [vmem:[%s178 + $0x7c] sm:$0xff]
        %v233 = vld [vmem:[%s178 + $0x84] sm:$0xff]
        %v234 = vld [vmem:[%s178 + $0x8c] sm:$0xf]
        %v235 = vld [vmem:[%s178 + $0x90] sm:$0xff]
        %v236 = vld [vmem:[%s178 + $0x98] sm:$0xff]
        %v237 = vld [vmem:[%s178 + $0xa0] sm:$0xff]
        %v238 = vld [vmem:[%s178 + $0xa8] sm:$0xff]
        %v239 = vld [vmem:[%s178 + $0xb0] sm:$0xf]
        %v240 = vld [vmem:[%s178 + $0xb4] sm:$0xff]
        %v241 = vld [vmem:[%s178 + $0xbc] sm:$0xff]
        %v242 = vld [vmem:[%s178 + $0xc4] sm:$0xff]
        %v243 = vld [vmem:[%s178 + $0xcc] sm:$0xff]
        %v244 = vld [vmem:[%s178 + $0xd4] sm:$0xf]
        %v245 = vld [vmem:[%s178 + $0xd8] sm:$0xff]
        %v246 = vld [vmem:[%s178 + $0xe0] sm:$0xff]
        %v247 = vld [vmem:[%s178 + $0xe8] sm:$0xff]
        %v248 = vld [vmem:[%s178 + $0xf0] sm:$0xff]
        %v249 = vld [vmem:[%s178 + $0xf8] sm:$0xf]
        %v250 = vld [vmem:[%s178 + $0xfc] sm:$0xff]
        %v251 = vld [vmem:[%s178 + $0x104] sm:$0xff]
        %v252 = vld [vmem:[%s178 + $0x10c] sm:$0xff]
        %v253 = vld [vmem:[%s178 + $0x114] sm:$0xff]
        %v254 = vld [vmem:[%s178 + $0x11c] sm:$0xf]
        %v295 = vunpack.c.l.b16 %v215
        %v296 = vunpack.c.h.b16 %v215
        %v297 = vunpack.c.l.b16 %v216
        %v298 = vunpack.c.h.b16 %v216
        %v299 = vunpack.c.l.b16 %v217
        %v300 = vunpack.c.h.b16 %v217
        %v301 = vunpack.c.l.b16 %v218
        %v302 = vunpack.c.h.b16 %v218
        %v303 = vunpack.c.l.b16 %v219
        %v304 = vunpack.c.l.b16 %v220
        %v305 = vunpack.c.h.b16 %v220
        %v306 = vunpack.c.l.b16 %v221
        %v307 = vunpack.c.h.b16 %v221
        %v308 = vunpack.c.l.b16 %v222
        %v309 = vunpack.c.h.b16 %v222
        %v310 = vunpack.c.l.b16 %v223
        %v311 = vunpack.c.h.b16 %v223
        %v312 = vunpack.c.l.b16 %v224
        %v313 = vunpack.c.l.b16 %v225
        %v314 = vunpack.c.h.b16 %v225
        %v315 = vunpack.c.l.b16 %v226
        %v316 = vunpack.c.h.b16 %v226
        %v317 = vunpack.c.l.b16 %v227
        %v318 = vunpack.c.h.b16 %v227
        %v319 = vunpack.c.l.b16 %v228
        %v320 = vunpack.c.h.b16 %v228
        %v321 = vunpack.c.l.b16 %v229
        %v322 = vunpack.c.l.b16 %v230
        %v323 = vunpack.c.h.b16 %v230
        %v324 = vunpack.c.l.b16 %v231
        %v325 = vunpack.c.h.b16 %v231
        %v326 = vunpack.c.l.b16 %v232
        %v327 = vunpack.c.h.b16 %v232
        %v328 = vunpack.c.l.b16 %v233
        %v329 = vunpack.c.h.b16 %v233
        %v330 = vunpack.c.l.b16 %v234
        %v331 = vunpack.c.l.b16 %v235
        %v332 = vunpack.c.h.b16 %v235
        %v333 = vunpack.c.l.b16 %v236
        %v334 = vunpack.c.h.b16 %v236
        %v335 = vunpack.c.l.b16 %v237
        %v336 = vunpack.c.h.b16 %v237
        %v337 = vunpack.c.l.b16 %v238
        %v338 = vunpack.c.h.b16 %v238
        %v339 = vunpack.c.l.b16 %v239
        %v340 = vunpack.c.l.b16 %v240
        %v341 = vunpack.c.h.b16 %v240
        %v342 = vunpack.c.l.b16 %v241
        %v343 = vunpack.c.h.b16 %v241
        %v344 = vunpack.c.l.b16 %v242
        %v345 = vunpack.c.h.b16 %v242
        %v346 = vunpack.c.l.b16 %v243
        %v347 = vunpack.c.h.b16 %v243
        %v348 = vunpack.c.l.b16 %v244
        %v349 = vunpack.c.l.b16 %v245
        %v350 = vunpack.c.h.b16 %v245
        %v351 = vunpack.c.l.b16 %v246
        %v352 = vunpack.c.h.b16 %v246
        %v353 = vunpack.c.l.b16 %v247
        %v354 = vunpack.c.h.b16 %v247
        %v355 = vunpack.c.l.b16 %v248
        %v356 = vunpack.c.h.b16 %v248
        %v357 = vunpack.c.l.b16 %v249
        %v358 = vunpack.c.l.b16 %v250
        %v359 = vunpack.c.h.b16 %v250
        %v360 = vunpack.c.l.b16 %v251
        %v361 = vunpack.c.h.b16 %v251
        %v362 = vunpack.c.l.b16 %v252
        %v363 = vunpack.c.h.b16 %v252
        %v364 = vunpack.c.l.b16 %v253
        %v365 = vunpack.c.h.b16 %v253
        %v366 = vunpack.c.l.b16 %v254
        %v367 = vpack.c.b16 %v304, %v295
        %v368 = vpack.c.b16 %v305, %v296
        %v369 = vpack.c.b16 %v306, %v297
        %v370 = vpack.c.b16 %v307, %v298
        %v371 = vpack.c.b16 %v308, %v299
        %v372 = vpack.c.b16 %v309, %v300
        %v373 = vpack.c.b16 %v310, %v301
        %v374 = vpack.c.b16 %v311, %v302
        %v375 = vpack.c.b16 %v312, %v303
        %v376 = vpack.c.b16 %v322, %v313
        %v377 = vpack.c.b16 %v323, %v314
        %v378 = vpack.c.b16 %v324, %v315
        %v379 = vpack.c.b16 %v325, %v316
        %v380 = vpack.c.b16 %v326, %v317
        %v381 = vpack.c.b16 %v327, %v318
        %v382 = vpack.c.b16 %v328, %v319
        %v383 = vpack.c.b16 %v329, %v320
        %v384 = vpack.c.b16 %v330, %v321
        %v385 = vpack.c.b16 %v340, %v331
        %v386 = vpack.c.b16 %v341, %v332
        %v387 = vpack.c.b16 %v342, %v333
        %v388 = vpack.c.b16 %v343, %v334
        %v389 = vpack.c.b16 %v344, %v335
        %v390 = vpack.c.b16 %v345, %v336
        %v391 = vpack.c.b16 %v346, %v337
        %v392 = vpack.c.b16 %v347, %v338
        %v393 = vpack.c.b16 %v348, %v339
        %v394 = vpack.c.b16 %v358, %v349
        %v395 = vpack.c.b16 %v359, %v350
        %v396 = vpack.c.b16 %v360, %v351
        %v397 = vpack.c.b16 %v361, %v352
        %v398 = vpack.c.b16 %v362, %v353
        %v399 = vpack.c.b16 %v363, %v354
        %v400 = vpack.c.b16 %v364, %v355
        %v401 = vpack.c.b16 %v365, %v356
        %v402 = vpack.c.b16 %v366, %v357
        %vm439 = vcmask 523264
        %v441 = vsel %vm439, %v214, 0
        %443 = vmatprep.subr.bf16.mxu0 %v368
        %444 = vmatpush1.bf16.msra.mxu0 %v367
        %445 = vmatprep.subr.bf16.mxu0 %v377
        %446 = vmatpush1.bf16.msra.mxu0 %v376
        %447 = vmatprep.subr.bf16.mxu0 %v386
        %448 = vmatpush1.bf16.msra.mxu0 %v385
        %449 = vmatprep.subr.bf16.mxu0 %v395
        %450 = vmatpush1.bf16.msra.mxu0 %v394
        %451 = vmatprep.subr.bf16.mxu0 0
        %452 = vmatpush1.bf16.msra.mxu0 0
        %453 = vmatprep.subr.bf16.mxu0 0
        %454 = vmatpush1.bf16.msra.mxu0 0
        %455 = vmatprep.subr.bf16.mxu0 0
        %456 = vmatpush1.bf16.msra.mxu0 0
        %457 = vmatprep.subr.bf16.mxu0 0
        %458 = vmatpush1.bf16.msra.mxu0 0
        %459 = vmatprep.subr.bf16.mxu0 0
        %460 = vmatpush1.bf16.msra.mxu0 0
        %461 = vmatprep.subr.bf16.mxu0 0
        %462 = vmatpush1.bf16.msra.mxu0 0
        %463 = vmatprep.subr.bf16.mxu0 0
        %464 = vmatpush1.bf16.msra.mxu0 0
        %465 = vmatprep.subr.bf16.mxu0 0
        %466 = vmatpush1.bf16.msra.mxu0 0
        %467 = vmatprep.subr.bf16.mxu0 0
        %468 = vmatpush1.bf16.msra.mxu0 0
        %469 = vmatprep.subr.bf16.mxu0 0
        %470 = vmatpush1.bf16.msra.mxu0 0
        %471 = vmatprep.subr.bf16.mxu0 0
        %472 = vmatpush1.bf16.msra.mxu0 0
        %473 = vmatprep.subr.bf16.mxu0 0
        %474 = vmatpush1.bf16.msra.mxu0 0
        %475 = vmatprep.mubr.bf16.mxu0 0
        %476 = vmatmul.mubr.bf16.gmra.mrb[0].mxu0 %v441
        %v477 = vpop.f32.mrb[0].mxu0
        %v478 = vadd.f32 0.0, %v477
        %v479 = vpop.f32.mrb[0].mxu0
        %v480 = vadd.f32 0.0, %v479
        %v481 = vpop.f32.mrb[0].mxu0
        %v482 = vpop.f32.mrb[0].mxu0
        %483 = vdwg.mxu0
        %484 = vmatprep.subr.bf16.mxu0 %v370
        %485 = vmatpush1.bf16.msra.mxu0 %v369
        %486 = vmatprep.subr.bf16.mxu0 %v379
        %487 = vmatpush1.bf16.msra.mxu0 %v378
        %488 = vmatprep.subr.bf16.mxu0 %v388
        %489 = vmatpush1.bf16.msra.mxu0 %v387
        %490 = vmatprep.subr.bf16.mxu0 %v397
        %491 = vmatpush1.bf16.msra.mxu0 %v396
        %492 = vmatprep.subr.bf16.mxu0 0
        %493 = vmatpush1.bf16.msra.mxu0 0
        %494 = vmatprep.subr.bf16.mxu0 0
        %495 = vmatpush1.bf16.msra.mxu0 0
        %496 = vmatprep.subr.bf16.mxu0 0
        %497 = vmatpush1.bf16.msra.mxu0 0
        %498 = vmatprep.subr.bf16.mxu0 0
        %499 = vmatpush1.bf16.msra.mxu0 0
        %500 = vmatprep.subr.bf16.mxu0 0
        %501 = vmatpush1.bf16.msra.mxu0 0
        %502 = vmatprep.subr.bf16.mxu0 0
        %503 = vmatpush1.bf16.msra.mxu0 0
        %504 = vmatprep.subr.bf16.mxu0 0
        %505 = vmatpush1.bf16.msra.mxu0 0
        %506 = vmatprep.subr.bf16.mxu0 0
        %507 = vmatpush1.bf16.msra.mxu0 0
        %508 = vmatprep.subr.bf16.mxu0 0
        %509 = vmatpush1.bf16.msra.mxu0 0
        %510 = vmatprep.subr.bf16.mxu0 0
        %511 = vmatpush1.bf16.msra.mxu0 0
        %512 = vmatprep.subr.bf16.mxu0 0
        %513 = vmatpush1.bf16.msra.mxu0 0
        %514 = vmatprep.subr.bf16.mxu0 0
        %515 = vmatpush1.bf16.msra.mxu0 0
        %516 = vmatprep.mubr.bf16.mxu0 0
        %517 = vmatmul.mubr.bf16.gmra.mrb[0].mxu0 %v441
        %v518 = vpop.f32.mrb[0].mxu0
        %v519 = vadd.f32 0.0, %v518
        %v520 = vpop.f32.mrb[0].mxu0
        %v521 = vadd.f32 0.0, %v520
        %v522 = vpop.f32.mrb[0].mxu0
        %v523 = vpop.f32.mrb[0].mxu0
        %524 = vdwg.mxu0
        %525 = vmatprep.subr.bf16.mxu0 %v372
        %526 = vmatpush1.bf16.msra.mxu0 %v371
        %527 = vmatprep.subr.bf16.mxu0 %v381
        %528 = vmatpush1.bf16.msra.mxu0 %v380
        %529 = vmatprep.subr.bf16.mxu0 %v390
        %530 = vmatpush1.bf16.msra.mxu0 %v389
        %531 = vmatprep.subr.bf16.mxu0 %v399
        %532 = vmatpush1.bf16.msra.mxu0 %v398
        %533 = vmatprep.subr.bf16.mxu0 0
        %534 = vmatpush1.bf16.msra.mxu0 0
        %535 = vmatprep.subr.bf16.mxu0 0
        %536 = vmatpush1.bf16.msra.mxu0 0
        %537 = vmatprep.subr.bf16.mxu0 0
        %538 = vmatpush1.bf16.msra.mxu0 0
        %539 = vmatprep.subr.bf16.mxu0 0
        %540 = vmatpush1.bf16.msra.mxu0 0
        %541 = vmatprep.subr.bf16.mxu0 0
        %542 = vmatpush1.bf16.msra.mxu0 0
        %543 = vmatprep.subr.bf16.mxu0 0
        %544 = vmatpush1.bf16.msra.mxu0 0
        %545 = vmatprep.subr.bf16.mxu0 0
        %546 = vmatpush1.bf16.msra.mxu0 0
        %547 = vmatprep.subr.bf16.mxu0 0
        %548 = vmatpush1.bf16.msra.mxu0 0
        %549 = vmatprep.subr.bf16.mxu0 0
        %550 = vmatpush1.bf16.msra.mxu0 0
        %551 = vmatprep.subr.bf16.mxu0 0
        %552 = vmatpush1.bf16.msra.mxu0 0
        %553 = vmatprep.subr.bf16.mxu0 0
        %554 = vmatpush1.bf16.msra.mxu0 0
        %555 = vmatprep.subr.bf16.mxu0 0
        %556 = vmatpush1.bf16.msra.mxu0 0
        %557 = vmatprep.mubr.bf16.mxu0 0
        %558 = vmatmul.mubr.bf16.gmra.mrb[0].mxu0 %v441
        %v559 = vpop.f32.mrb[0].mxu0
        %v560 = vadd.f32 0.0, %v559
        %v561 = vpop.f32.mrb[0].mxu0
        %v562 = vadd.f32 0.0, %v561
        %v563 = vpop.f32.mrb[0].mxu0
        %v564 = vpop.f32.mrb[0].mxu0
        %565 = vdwg.mxu0
        %566 = vmatprep.subr.bf16.mxu0 %v374
        %567 = vmatpush1.bf16.msra.mxu0 %v373
        %568 = vmatprep.subr.bf16.mxu0 %v383
        %569 = vmatpush1.bf16.msra.mxu0 %v382
        %570 = vmatprep.subr.bf16.mxu0 %v392
        %571 = vmatpush1.bf16.msra.mxu0 %v391
        %572 = vmatprep.subr.bf16.mxu0 %v401
        %573 = vmatpush1.bf16.msra.mxu0 %v400
        %574 = vmatprep.subr.bf16.mxu0 0
        %575 = vmatpush1.bf16.msra.mxu0 0
        %576 = vmatprep.subr.bf16.mxu0 0
        %577 = vmatpush1.bf16.msra.mxu0 0
        %578 = vmatprep.subr.bf16.mxu0 0
        %579 = vmatpush1.bf16.msra.mxu0 0
        %580 = vmatprep.subr.bf16.mxu0 0
        %581 = vmatpush1.bf16.msra.mxu0 0
        %582 = vmatprep.subr.bf16.mxu0 0
        %583 = vmatpush1.bf16.msra.mxu0 0
        %584 = vmatprep.subr.bf16.mxu0 0
        %585 = vmatpush1.bf16.msra.mxu0 0
        %586 = vmatprep.subr.bf16.mxu0 0
        %587 = vmatpush1.bf16.msra.mxu0 0
        %588 = vmatprep.subr.bf16.mxu0 0
        %589 = vmatpush1.bf16.msra.mxu0 0
        %590 = vmatprep.subr.bf16.mxu0 0
        %591 = vmatpush1.bf16.msra.mxu0 0
        %592 = vmatprep.subr.bf16.mxu0 0
        %593 = vmatpush1.bf16.msra.mxu0 0
        %594 = vmatprep.subr.bf16.mxu0 0
        %595 = vmatpush1.bf16.msra.mxu0 0
        %596 = vmatprep.subr.bf16.mxu0 0
        %597 = vmatpush1.bf16.msra.mxu0 0
        %598 = vmatprep.mubr.bf16.mxu0 0
        %599 = vmatmul.mubr.bf16.gmra.mrb[0].mxu0 %v441
        %v600 = vpop.f32.mrb[0].mxu0
        %v601 = vadd.f32 0.0, %v600
        %v602 = vpop.f32.mrb[0].mxu0
        %v603 = vadd.f32 0.0, %v602
        %v604 = vpop.f32.mrb[0].mxu0
        %v605 = vpop.f32.mrb[0].mxu0
        %606 = vdwg.mxu0
        %607 = vmatprep.subr.bf16.mxu0 0
        %608 = vmatpush1.bf16.msra.mxu0 %v375
        %609 = vmatprep.subr.bf16.mxu0 0
        %610 = vmatpush1.bf16.msra.mxu0 %v384
        %611 = vmatprep.subr.bf16.mxu0 0
        %612 = vmatpush1.bf16.msra.mxu0 %v393
        %613 = vmatprep.subr.bf16.mxu0 0
        %614 = vmatpush1.bf16.msra.mxu0 %v402
        %615 = vmatprep.subr.bf16.mxu0 0
        %616 = vmatpush1.bf16.msra.mxu0 0
        %617 = vmatprep.subr.bf16.mxu0 0
        %618 = vmatpush1.bf16.msra.mxu0 0
        %619 = vmatprep.subr.bf16.mxu0 0
        %620 = vmatpush1.bf16.msra.mxu0 0
        %621 = vmatprep.subr.bf16.mxu0 0
        %622 = vmatpush1.bf16.msra.mxu0 0
        %623 = vmatprep.subr.bf16.mxu0 0
        %624 = vmatpush1.bf16.msra.mxu0 0
        %625 = vmatprep.subr.bf16.mxu0 0
        %626 = vmatpush1.bf16.msra.mxu0 0
        %627 = vmatprep.subr.bf16.mxu0 0
        %628 = vmatpush1.bf16.msra.mxu0 0
        %629 = vmatprep.subr.bf16.mxu0 0
        %630 = vmatpush1.bf16.msra.mxu0 0
        %631 = vmatprep.subr.bf16.mxu0 0
        %632 = vmatpush1.bf16.msra.mxu0 0
        %633 = vmatprep.subr.bf16.mxu0 0
        %634 = vmatpush1.bf16.msra.mxu0 0
        %635 = vmatprep.subr.bf16.mxu0 0
        %636 = vmatpush1.bf16.msra.mxu0 0
        %637 = vmatprep.subr.bf16.mxu0 0
        %638 = vmatpush1.bf16.msra.mxu0 0
        %639 = vmatprep.mubr.bf16.mxu0 0
        %640 = vmatmul.mubr.bf16.gmra.mrb[0].mxu0 %v441
        %v641 = vpop.f32.mrb[0].mxu0
        %v642 = vadd.f32 0.0, %v641
        %v643 = vpop.f32.mrb[0].mxu0
        %v644 = vpop.f32.mrb[0].mxu0
        %v645 = vpop.f32.mrb[0].mxu0
        %646 = vdwg.mxu0
        %v647 = vpack.c.bf16 %v478, %v478
        %v648 = vpack.c.bf16 %v480, %v480
        %v649 = vpack.c.bf16 %v519, %v519
        %v650 = vpack.c.bf16 %v521, %v521
        %v651 = vpack.c.bf16 %v560, %v560
        %v652 = vpack.c.bf16 %v562, %v562
        %v653 = vpack.c.bf16 %v601, %v601
        %v654 = vpack.c.bf16 %v603, %v603
        %v655 = vpack.c.bf16 %v642, %v642
        %v665 = vunpack.c.l.b16 %v647
        %v666 = vunpack.c.l.b16 %v648
        %v667 = vunpack.c.l.b16 %v649
        %v668 = vunpack.c.l.b16 %v650
        %v669 = vunpack.c.l.b16 %v651
        %v670 = vunpack.c.l.b16 %v652
        %v671 = vunpack.c.l.b16 %v653
        %v672 = vunpack.c.l.b16 %v654
        %v673 = vunpack.c.l.b16 %v655
        %v674 = vpack.c.b16 %v666, %v665
        %v675 = vpack.c.b16 %v668, %v667
        %v676 = vpack.c.b16 %v670, %v669
        %v677 = vpack.c.b16 %v672, %v671
        %v678 = vpack.c.b16 %v673, %v673
        %684 = vst [vmem:[%s202] sm:$0xff] %v674
        %685 = vst [vmem:[%s202 + $0x8] sm:$0xff] %v675
        %686 = vst [vmem:[%s202 + $0x10] sm:$0xff] %v676
        %687 = vst [vmem:[%s202 + $0x18] sm:$0xff] %v677
        %vm688 = vcmask 781312
        %689 = vst.msk [vmem:[%s202 + $0x20] sm:$0xf] %vm688, %v678
        %v690 = vlaneseq
        %v691 = vand.u32 %v690, 127
        %v692 = vadd.s32 %v691, 128
        %v693 = vadd.s32 %v691, 256
        %v694 = vadd.s32 %v691, 384
        %v695 = vadd.s32 %v691, 512
        %v696 = vadd.s32 %v691, 640
        %v697 = vadd.s32 %v691, 768
        %v698 = vadd.s32 %v691, 896
        %v699 = vadd.s32 %v691, 1024
        %vm700 = vcmp.lt.s32.totalorder %v691, 0
        %v701 = vsub.s32 0, %v691
        %v702 = vsel %vm700, %v701, %v691
        %v703 = vmul.u32.u64.compose %v702, 3926827242
        %v704 = vextract.low.u32 %v703
        %v705 = vextract.high.u32 %v703
        %vm706 = vc.u32 %v704, 3926827242
        %v707 = vsel %vm706, 1, 0
        %v708 = vadd.s32 %v705, %v707
        %v709 = vshrl.u32 %v708, 5
        %v710 = vmul.u32 %v709, 35
        %v711 = vsub.s32 %v702, %v710
        %v712 = vsub.s32 0, %v711
        %v713 = vsel %vm700, %v712, %v711
        %vm714 = vcmp.lt.s32.totalorder %v692, 0
        %v715 = vsub.s32 0, %v692
        %v716 = vsel %vm714, %v715, %v692
        %v717 = vmul.u32.u64.compose %v716, 3926827242
        %v718 = vextract.low.u32 %v717
        %v719 = vextract.high.u32 %v717
        %vm720 = vc.u32 %v718, 3926827242
        %v721 = vsel %vm720, 1, 0
        %v722 = vadd.s32 %v719, %v721
        %v723 = vshrl.u32 %v722, 5
        %v724 = vmul.u32 %v723, 35
        %v725 = vsub.s32 %v716, %v724
        %v726 = vsub.s32 0, %v725
        %v727 = vsel %vm714, %v726, %v725
        %vm728 = vcmp.lt.s32.totalorder %v693, 0
        %v729 = vsub.s32 0, %v693
        %v730 = vsel %vm728, %v729, %v693
        %v731 = vmul.u32.u64.compose %v730, 3926827242
        %v732 = vextract.low.u32 %v731
        %v733 = vextract.high.u32 %v731
        %vm734 = vc.u32 %v732, 3926827242
        %v735 = vsel %vm734, 1, 0
        %v736 = vadd.s32 %v733, %v735
        %v737 = vshrl.u32 %v736, 5
        %v738 = vmul.u32 %v737, 35
        %v739 = vsub.s32 %v730, %v738
        %v740 = vsub.s32 0, %v739
        %v741 = vsel %vm728, %v740, %v739
        %vm742 = vcmp.lt.s32.totalorder %v694, 0
        %v743 = vsub.s32 0, %v694
        %v744 = vsel %vm742, %v743, %v694
        %v745 = vmul.u32.u64.compose %v744, 3926827242
        %v746 = vextract.low.u32 %v745
        %v747 = vextract.high.u32 %v745
        %vm748 = vc.u32 %v746, 3926827242
        %v749 = vsel %vm748, 1, 0
        %v750 = vadd.s32 %v747, %v749
        %v751 = vshrl.u32 %v750, 5
        %v752 = vmul.u32 %v751, 35
        %v753 = vsub.s32 %v744, %v752
        %v754 = vsub.s32 0, %v753
        %v755 = vsel %vm742, %v754, %v753
        %vm756 = vcmp.lt.s32.totalorder %v695, 0
        %v757 = vsub.s32 0, %v695
        %v758 = vsel %vm756, %v757, %v695
        %v759 = vmul.u32.u64.compose %v758, 3926827242
        %v760 = vextract.low.u32 %v759
        %v761 = vextract.high.u32 %v759
        %vm762 = vc.u32 %v760, 3926827242
        %v763 = vsel %vm762, 1, 0
        %v764 = vadd.s32 %v761, %v763
        %v765 = vshrl.u32 %v764, 5
        %v766 = vmul.u32 %v765, 35
        %v767 = vsub.s32 %v758, %v766
        %v768 = vsub.s32 0, %v767
        %v769 = vsel %vm756, %v768, %v767
        %vm770 = vcmp.lt.s32.totalorder %v696, 0
        %v771 = vsub.s32 0, %v696
        %v772 = vsel %vm770, %v771, %v696
        %v773 = vmul.u32.u64.compose %v772, 3926827242
        %v774 = vextract.low.u32 %v773
        %v775 = vextract.high.u32 %v773
        %vm776 = vc.u32 %v774, 3926827242
        %v777 = vsel %vm776, 1, 0
        %v778 = vadd.s32 %v775, %v777
        %v779 = vshrl.u32 %v778, 5
        %v780 = vmul.u32 %v779, 35
        %v781 = vsub.s32 %v772, %v780
        %v782 = vsub.s32 0, %v781
        %v783 = vsel %vm770, %v782, %v781
        %vm784 = vcmp.lt.s32.totalorder %v697, 0
        %v785 = vsub.s32 0, %v697
        %v786 = vsel %vm784, %v785, %v697
        %v787 = vmul.u32.u64.compose %v786, 3926827242
        %v788 = vextract.low.u32 %v787
        %v789 = vextract.high.u32 %v787
        %vm790 = vc.u32 %v788, 3926827242
        %v791 = vsel %vm790, 1, 0
        %v792 = vadd.s32 %v789, %v791
        %v793 = vshrl.u32 %v792, 5
        %v794 = vmul.u32 %v793, 35
        %v795 = vsub.s32 %v786, %v794
        %v796 = vsub.s32 0, %v795
        %v797 = vsel %vm784, %v796, %v795
        %vm798 = vcmp.lt.s32.totalorder %v698, 0
        %v799 = vsub.s32 0, %v698
        %v800 = vsel %vm798, %v799, %v698
        %v801 = vmul.u32.u64.compose %v800, 3926827242
        %v802 = vextract.low.u32 %v801
        %v803 = vextract.high.u32 %v801
        %vm804 = vc.u32 %v802, 3926827242
        %v805 = vsel %vm804, 1, 0
        %v806 = vadd.s32 %v803, %v805
        %v807 = vshrl.u32 %v806, 5
        %v808 = vmul.u32 %v807, 35
        %v809 = vsub.s32 %v800, %v808
        %v810 = vsub.s32 0, %v809
        %v811 = vsel %vm798, %v810, %v809
        %vm812 = vcmp.lt.s32.totalorder %v699, 0
        %v813 = vsub.s32 0, %v699
        %v814 = vsel %vm812, %v813, %v699
        %v815 = vmul.u32.u64.compose %v814, 3926827242
        %v816 = vextract.low.u32 %v815
        %v817 = vextract.high.u32 %v815
        %vm818 = vc.u32 %v816, 3926827242
        %v819 = vsel %vm818, 1, 0
        %v820 = vadd.s32 %v817, %v819
        %v821 = vshrl.u32 %v820, 5
        %v822 = vmul.u32 %v821, 35
        %v823 = vsub.s32 %v814, %v822
        %v824 = vsub.s32 0, %v823
        %v825 = vsel %vm812, %v824, %v823
        %vm826 = vcmp.ne.s32.totalorder %v713, 0
        %vm827 = vcmp.ne.s32.totalorder %v727, 0
        %vm828 = vcmp.ne.s32.totalorder %v741, 0
        %vm829 = vcmp.ne.s32.totalorder %v755, 0
        %vm830 = vcmp.ne.s32.totalorder %v769, 0
        %vm831 = vcmp.ne.s32.totalorder %v783, 0
        %vm832 = vcmp.ne.s32.totalorder %v797, 0
        %vm833 = vcmp.ne.s32.totalorder %v811, 0
        %vm834 = vcmp.ne.s32.totalorder %v825, 0
        %vm835 = vcmp.lt.s32.totalorder %v713, 0
        %vm836 = vcmp.lt.s32.totalorder %v727, 0
        %vm837 = vcmp.lt.s32.totalorder %v741, 0
        %vm838 = vcmp.lt.s32.totalorder %v755, 0
        %vm839 = vcmp.lt.s32.totalorder %v769, 0
        %vm840 = vcmp.lt.s32.totalorder %v783, 0
        %vm841 = vcmp.lt.s32.totalorder %v797, 0
        %vm842 = vcmp.lt.s32.totalorder %v811, 0
        %vm843 = vcmp.lt.s32.totalorder %v825, 0
        %vm844 = vmand %vm835, %vm826
        %vm845 = vmand %vm836, %vm827
        %vm846 = vmand %vm837, %vm828
        %vm847 = vmand %vm838, %vm829
        %vm848 = vmand %vm839, %vm830
        %vm849 = vmand %vm840, %vm831
        %vm850 = vmand %vm841, %vm832
        %vm851 = vmand %vm842, %vm833
        %vm852 = vmand %vm843, %vm834
        %v853 = vadd.s32 %v713, 35
        %v854 = vadd.s32 %v727, 35
        %v855 = vadd.s32 %v741, 35
        %v856 = vadd.s32 %v755, 35
        %v857 = vadd.s32 %v769, 35
        %v858 = vadd.s32 %v783, 35
        %v859 = vadd.s32 %v797, 35
        %v860 = vadd.s32 %v811, 35
        %v861 = vadd.s32 %v825, 35
        %v862 = vsel %vm844, %v853, %v713
        %v863 = vsel %vm845, %v854, %v727
        %v864 = vsel %vm846, %v855, %v741
        %v865 = vsel %vm847, %v856, %v755
        %v866 = vsel %vm848, %v857, %v769
        %v867 = vsel %vm849, %v858, %v783
        %v868 = vsel %vm850, %v859, %v797
        %v869 = vsel %vm851, %v860, %v811
        %v870 = vsel %vm852, %v861, %v825
        %vm871 = vcmp.lt.s32.totalorder %v862, 32
        %vm872 = vcmp.lt.s32.totalorder %v863, 32
        %vm873 = vcmp.lt.s32.totalorder %v864, 32
        %vm874 = vcmp.lt.s32.totalorder %v865, 32
        %vm875 = vcmp.lt.s32.totalorder %v866, 32
        %vm876 = vcmp.lt.s32.totalorder %v867, 32
        %vm877 = vcmp.lt.s32.totalorder %v868, 32
        %vm878 = vcmp.lt.s32.totalorder %v869, 32
        %vm879 = vcmp.lt.s32.totalorder %v870, 32
        %v880 = vsel %vm871, %v478, 0.0
        %v881 = vsel %vm872, %v480, 0.0
        %v882 = vsel %vm873, %v519, 0.0
        %v883 = vsel %vm874, %v521, 0.0
        %v884 = vsel %vm875, %v560, 0.0
        %v885 = vsel %vm876, %v562, 0.0
        %v886 = vsel %vm877, %v601, 0.0
        %v887 = vsel %vm878, %v603, 0.0
        %v888 = vsel %vm879, %v642, 0.0
        %v889 = vadd.f32 %v880, %v881
        %v890 = vadd.f32 %v889, %v882
        %v891 = vadd.f32 %v890, %v883
        %v892 = vadd.f32 %v891, %v884
        %v893 = vadd.f32 %v892, %v885
        %v894 = vadd.f32 %v893, %v886
        %v895 = vadd.f32 %v894, %v887
        %vm896 = vcmask 785408
        %v897 = vsel %vm896, %v888, 0.0
        %v898 = vadd.f32 %v895, %v897
        %899 = vadd.xlane.f32.xlu0 %v898
        %v900 = vpop.xlane.xlu0 %899
        %vm901 = vcmask 7168
        %902 = vst.msk [vmem:[%s212] sm:$0xff] %vm901, %v900
        %v903 = vmul.f32 %v880, %v880
        %v904 = vmul.f32 %v881, %v881
        %v905 = vmul.f32 %v882, %v882
        %v906 = vmul.f32 %v883, %v883
        %v907 = vmul.f32 %v884, %v884
        %v908 = vmul.f32 %v885, %v885
        %v909 = vmul.f32 %v886, %v886
        %v910 = vmul.f32 %v887, %v887
        %v911 = vmul.f32 %v888, %v888
        %v912 = vadd.f32 %v903, %v904
        %v913 = vadd.f32 %v912, %v905
        %v914 = vadd.f32 %v913, %v906
        %v915 = vadd.f32 %v914, %v907
        %v916 = vadd.f32 %v915, %v908
        %v917 = vadd.f32 %v916, %v909
        %v918 = vadd.f32 %v917, %v910
        %v919 = vsel %vm896, %v911, 0.0
        %v920 = vadd.f32 %v918, %v919
        %921 = vadd.xlane.f32.xlu0 %v920
        %v922 = vpop.xlane.xlu0 %921
        %vm923 = vcmask 15368
        %924 = vst.msk [vmem:[%s212] sm:$0xff] %vm923, %v922
        %s925 = sand.u32 %s77, 1
        %s926 = scalar_lea.sflag [#allocation4], %s925
        %s927 = sand.u32 %s77, 1
        %s928 = smul.addr %s927, 36
        %s929 = scalar_lea.vmem [#allocation7], %s928
        %p930 = scmp.lt.s32.totalorder %s22, 1
        %s931 = scalar_select %p930, %s22, 1
        %s932 = smul.addr %s931, 8
        %s933 = scalar_lea.vmem %s3, %s932
        // Predicated region
        $region37: #{tpu_custom_call.1} parent=27 // pred_check
          %p934 = pneg %p87
        $region38: #{tpu_custom_call.1} parent=27 // pred_check_branch
          %936 = sbr.rel (%p934) target = $region40
        $region39: #{tpu_custom_call.1} parent=27 // pred_region
          %s938 = ssub.s32 576, 576
          %939 = vsyncadd %s926, %s938
          %s940 = smul.addr %s22, 9
          %s941 = smul.addr %s940, 64
          %s942 = scalar_lea.hbm %s2, %s941
          %s944 = sshll.u32 %s929, 4
          %s945 = int_to_ptr.vmem [resolvable:$true] %s944
          %947 = dma.vmem_to_hbm [thread:$0]  %s945, 576, %s942, %s926
        $region40: #{tpu_custom_call.1} parent=27 // pred_fallthru
          _
        // Predicated region
        $region41: #{tpu_custom_call.1} parent=27 // pred_check
          %p948 = pneg %p113
        $region42: #{tpu_custom_call.1} parent=27 // pred_check_branch
          %950 = sbr.rel (%p948) target = $region44
        $region43: #{tpu_custom_call.1} parent=27 // pred_region
          _
        $region44: #{tpu_custom_call.1} parent=27 // pred_fallthru
          _
      $region28: #{tpu_custom_call.1} parent=5 // pred_fallthru
        _
      %p951 = scmp.le.s32.totalorder 2, %s17
      // Predicated region
      $region45: #{tpu_custom_call.1} parent=5 // pred_check
        %p952 = pneg %p951
      $region46: #{tpu_custom_call.1} parent=5 // pred_check_branch
        %954 = sbr.rel (%p952) target = $region48
      $region47: #{tpu_custom_call.1} parent=5 // pred_region
        %s955 = ssub.s32 %s17, 2
        // Predicated region
        $region49: #{tpu_custom_call.1} parent=47 // pred_check
          %p956 = pneg %p93
        $region50: #{tpu_custom_call.1} parent=47 // pred_check_branch
          %958 = sbr.rel (%p956) target = $region52
        $region51: #{tpu_custom_call.1} parent=47 // pred_region
          %s959 = sand.u32 %s78, 1
          %s960 = scalar_lea.sflag [#allocation4], %s959
          %s961 = sand.u32 %s78, 1
          %s962 = smul.addr %s961, 36
          %s963 = scalar_lea.vmem [#allocation7], %s962
          %964 = dma.done %s960, 576
        $region52: #{tpu_custom_call.1} parent=47 // pred_fallthru
          _
        // Predicated region
        $region53: #{tpu_custom_call.1} parent=47 // pred_check
          %p965 = pneg %p119
        $region54: #{tpu_custom_call.1} parent=47 // pred_check_branch
          %967 = sbr.rel (%p965) target = $region56
        $region55: #{tpu_custom_call.1} parent=47 // pred_region
          %p968 = scmp.lt.s32.totalorder %s23, 1
          %s969 = scalar_select %p968, %s23, 1
          %s970 = smul.addr %s969, 8
          %s971 = scalar_lea.vmem %s3, %s970
        $region56: #{tpu_custom_call.1} parent=47 // pred_fallthru
          _
      $region48: #{tpu_custom_call.1} parent=5 // pred_fallthru
        _
    $region6: #{tpu_custom_call.1} parent=1 // loop_footer
      %s21 = sadd.s32 1, %s17
    $region7: #{tpu_custom_call.1} parent=1 // loop_footer_branch
      %16 = sbr.rel target = $region3
    $region8: #{tpu_custom_call.1} parent=1 // loop_exit
      _
    %972 = vsyncpa [#allocation3], 1
    %s973 = scalar_lea.sflag [#allocation3], 1
    %974 = vsyncpa %s973, 1
    %975 = vsyncpa [#allocation6], 1
    %976 = vsyncpa [#allocation4], 1
    %s977 = scalar_lea.sflag [#allocation4], 1
    %978 = vsyncpa %s977, 1

</llo_original>
